<compile_context>
chip_gen: v5e
topology: v5e:2x2
jax: 0.10.0
libtpu: 0.0.40
codegen_flags: <defaults>
</compile_context>

<pallas_src>
import functools
import math

import jax
import jax.numpy as jnp
from jax.experimental import pallas as pl
from jax.experimental.pallas import tpu as pltpu


def _round_up(a, b):
    return ((a + b - 1) // b) * b


# ----------------------------- Pallas kernel --------------------------------

def codebook_kernel(x_ref, wt_ref, half_wn_ref, gwide_ref, out_ref, *,
                    num_embeddings, pack, exact_ties):
    # x_ref:       (tm, D)        patch rows, pipelined over the grid
    # wt_ref:      (D, K)         codebook transposed (grid-invariant)
    # half_wn_ref: (1, K)         0.5 * ||w_k||^2
    # gwide_ref:   (pack*K, 128)  block-diagonal Gaussian lookup table
    # out_ref:     (tm//pack, 128) lane-dense quantized patches
    K = num_embeddings
    x = x_ref[...]                                                   # (tm, D)

    # scores s[m,k] = x_m . w_k  (MXU);  argmin_k ||x - w_k||^2
    # == argmin_k (0.5*||w_k||^2 - s[m,k])   (||x||^2 dropped: row-constant)
    s = jnp.dot(x.astype(wt_ref.dtype), wt_ref[...],
                preferred_element_type=jnp.float32)                  # (tm, K)
    d = half_wn_ref[...] - s                                         # (tm, K)

    d_min = jnp.min(d, axis=-1, keepdims=True)                       # (tm, 1)
    if exact_ties:
        # torch.argmin first-occurrence tie-breaking (2nd XLU reduction)
        k_iota = jax.lax.broadcasted_iota(jnp.int32, d.shape, 1)
        bmu = jnp.min(jnp.where(d == d_min, k_iota, K),
                      axis=-1, keepdims=True)                        # (tm, 1)
        one_hot = (k_iota == bmu).astype(jnp.float32)                # (tm, K)
    else:
        # single lane-reduction; exact f32 ties (measure-zero) would sum rows
        one_hot = (d == d_min).astype(jnp.float32)                   # (tm, K)

    # Pack `pack` row-groups into the lane axis: whole-vreg copies only
    # (sublane slices at 8-aligned offsets placed at 128-aligned lane offsets).
    tm = one_hot.shape[0]
    tm8 = tm // pack
    oh_cat = jnp.concatenate(
        [one_hot[r * tm8:(r + 1) * tm8, :] for r in range(pack)],
        axis=-1)                                                     # (tm8, pack*K)

    # quantized rows via one-hot @ block-diagonal G_wide (MXU); lane-dense store
    out_ref[...] = jnp.dot(oh_cat, gwide_ref[...],
                           preferred_element_type=jnp.float32
                           ).astype(out_ref.dtype)                   # (tm8, 128)


# ------------------------------ JAX glue -------------------------------------

def patchify(x, patch_dim):
    # x: (N, C, H, W)  ->  (N, Seq, C*pH*pW)
    N, C, H, W = x.shape
    pH, pW = patch_dim
    gh, gw = H // pH, W // pW
    x = x.reshape(N, C, gh, pH, gw, pW)
    x = jnp.transpose(x, (0, 2, 4, 1, 3, 5))                  # (N, gh, gw, C, pH, pW)
    return x.reshape(N, gh * gw, C * pH * pW)


def unpatchify(patches, image_dim, patch_dim, channels):
    # (N, Seq, C*pH*pW)  ->  (N, C, H, W)
    N, Seq, D = patches.shape
    H, W = image_dim
    pH, pW = patch_dim
    gh, gw = H // pH, W // pW
    x = patches.reshape(N, gh, gw, channels, pH, pW)
    x = jnp.transpose(x, (0, 3, 1, 4, 2, 5))                  # (N, C, gh, pH, gw, pW)
    return x.reshape(N, channels, H, W)


def make_codebook_tables(codebook_weight, neighbourhood_range, *, bf16_scores=False):
    """Grid-invariant codebook prep. Call once per weight update, reuse across
    forwards (hoisted out of codebook_forward per review)."""
    K, D = codebook_weight.shape
    if D > 128 or 128 % D != 0:
        # TODO(synk): add a narrow (tm, D) output fallback for D not dividing 128.
        raise NotImplementedError("lane-dense packing assumes embedding_dim | 128")
    pack = 128 // D

    w = codebook_weight.astype(jnp.float32)
    w_t = w.T                                                 # (D, K)
    half_w_norm = 0.5 * jnp.sum(w * w, axis=-1)[None, :]      # (1, K)

    # Gaussian neighbourhood folded into a lookup table:
    #   T[b,k] = exp(-(k-b)^2/(2*var)),  G = T @ W  =>  quantized(row) = G[bmu]
    variance = -(neighbourhood_range / (2.0 * math.log(0.1)))
    idx = jnp.arange(K, dtype=jnp.float32)
    diff = idx[None, :] - idx[:, None]                        # (K, K), diff[b,k]=k-b
    T = jnp.exp(-(diff * diff) / (2.0 * variance))
    G = jnp.dot(T, w)                                         # (K, D)

    # Block-diagonal widening for the lane-dense output path: (pack*K, 128)
    g_wide = jnp.zeros((pack * K, pack * D), jnp.float32)
    for r in range(pack):
        g_wide = g_wide.at[r * K:(r + 1) * K, r * D:(r + 1) * D].set(G)

    if bf16_scores:
        w_t = w_t.astype(jnp.bfloat16)
    return w_t, half_w_norm, g_wide


def _pick_tile(M, K, pack):
    """Choose a row-tile size: multiple of 8*pack, VMEM-budgeted, preferring a
    divisor of M (no pad) and >=2 grid steps (v7x megacore)."""
    row_align = 8 * pack
    # keep the handful of (tm, K) f32 temps well under the default scoped VMEM
    budget_rows = max(row_align, (6 * 1024 * 1024) // (4 * K))
    cap = min(1024, budget_rows, M)
    cap = max(row_align, (cap // row_align) * row_align)

    def largest_divisor(limit):
        t = (limit // row_align) * row_align
        while t >= row_align:
            if M % t == 0:
                return t
            t -= row_align
        return None

    tm = largest_divisor(cap)
    if tm is not None:
        if M // tm < 2 and M >= 2 * row_align:
            smaller = largest_divisor(min(cap, M // 2))
            if smaller is not None:
                tm = smaller                                 # >=2 steps for 2 TCs
        return tm, M                                         # no padding needed
    # fallback: pad M up to a multiple of an aligned tile
    tm = cap
    if (M + tm - 1) // tm < 2 and M > row_align:
        tm = min(cap, _round_up((M + 1) // 2, row_align))
    return tm, _round_up(M, tm)


def codebook_forward(x, w_t, half_w_norm, g_wide, *, patch_dim=(2, 2),
                     exact_ties=False):
    """Equivalent of Codebook.forward(x, use_gaussian=True)."""
    N, C, H, W = x.shape
    pH, pW = patch_dim
    D, K = w_t.shape
    pack = 128 // D
    assert D == C * pH * pW, "codebook embedding_dim mismatch"
    assert g_wide.shape == (pack * K, pack * D)

    patches = patchify(x, patch_dim)                          # (N, Seq, D)
    Seq = patches.shape[1]
    M = N * Seq
    x_flat = patches.reshape(M, D)
    x_flat = x_flat.astype(jnp.bfloat16 if w_t.dtype == jnp.bfloat16
                           else jnp.float32)

    tm, M_pad = _pick_tile(M, K, pack)
    if M_pad != M:
        # TODO(synk): handle the ragged last tile in-kernel to skip this pad.
        x_flat = jnp.pad(x_flat, ((0, M_pad - M), (0, 0)))
    tm8 = tm // pack
    grid = M_pad // tm

    kernel = functools.partial(codebook_kernel, num_embeddings=K, pack=pack,
                               exact_ties=exact_ties)

    out_wide = pl.pallas_call(
        kernel,
        out_shape=jax.ShapeDtypeStruct((M_pad // pack, pack * D), jnp.float32),
        grid_spec=pltpu.PrefetchScalarGridSpec(
            num_scalar_prefetch=0,
            grid=(grid,),
            in_specs=[
                pl.BlockSpec((tm, D), lambda i: (i, 0)),            # patch rows
                pl.BlockSpec((D, K), lambda i: (0, 0)),             # w^T (resident)
                pl.BlockSpec((1, K), lambda i: (0, 0)),             # 0.5||w||^2
                pl.BlockSpec((pack * K, pack * D), lambda i: (0, 0)),  # G_wide
            ],
            out_specs=pl.BlockSpec((tm8, pack * D), lambda i: (i, 0)),
        ),
        compiler_params=pltpu.CompilerParams(
            dimension_semantics=("parallel",),
        ),
    )(x_flat, w_t, half_w_norm, g_wide)

    # Unscramble the per-tile lane packing: physical row (i*tm8 + m'), lane
    # block r holds logical patch row (i*tm + r*tm8 + m').  This permutation
    # fuses with unpatchify's transpose under jit.
    q = out_wide.reshape(grid, tm8, pack, D)
    q = jnp.transpose(q, (0, 2, 1, 3)).reshape(M_pad, D)
    quant = q[:M].reshape(N, Seq, D)
    return unpatchify(quant, (H, W), patch_dim, C)


# ------------------------------- main ----------------------------------------

if __name__ == "__main__":
    # Small, module-consistent shapes:
    #   image_dim=(16,16), patch_dim=(2,2), image_channel=4
    #   -> embedding_dim D = 4*2*2 = 16, Seq = 8*8 = 64
    #   num_embeddings K = 128, neighbourhood_range = 64, batch N = 2
    N, C, H, W = 2, 4, 16, 16
    patch_dim = (2, 2)
    num_embeddings = 128
    neighbourhood_range = 64
    embedding_dim = C * patch_dim[0] * patch_dim[1]

    key = jax.random.PRNGKey(0)
    k_w, k_x = jax.random.split(key)

    # nn.Embedding weight init: uniform(-1/K, 1/K), deterministic here.
    codebook_weight = jax.random.uniform(
        k_w, (num_embeddings, embedding_dim), dtype=jnp.float32,
        minval=-1.0 / num_embeddings, maxval=1.0 / num_embeddings)

    x = jax.random.normal(k_x, (N, C, H, W), dtype=jnp.float32)

    # Codebook prep hoisted: computed once per weight update, reused per forward.
    w_t, half_w_norm, g_wide = make_codebook_tables(
        codebook_weight, neighbourhood_range)

    fwd = jax.jit(functools.partial(codebook_forward, patch_dim=patch_dim))
    out = fwd(x, w_t, half_w_norm, g_wide)
    out = jax.block_until_ready(out)

    assert out.shape == (N, C, H, W), out.shape
    assert jnp.all(jnp.isfinite(out))

    print("KERNEL_OK")
</pallas_src>

<mosaic_0001>
module attributes {stable_mosaic.version = 11 : i64} {
  func.func @codebook_kernel(%arg0: i32, %arg1: memref<64x16xf32, #tpu.memory_space<vmem>>, %arg2: memref<16x128xf32, #tpu.memory_space<vmem>>, %arg3: memref<1x128xf32, #tpu.memory_space<vmem>>, %arg4: memref<1024x128xf32, #tpu.memory_space<vmem>>, %arg5: memref<8x128xf32, #tpu.memory_space<vmem>>) attributes {dimension_semantics = [#tpu.dimension_semantics<parallel>], iteration_bounds = array<i64: 2>, scalar_prefetch = 0 : i64, scratch_operands = 0 : i64, tpu.core_type = #tpu.core_type<tc>, window_params = [{transform_indices = @transform_0, window_bounds = array<i64: 64, 16>}, {pipeline_mode = #tpu.pipeline_mode<synchronous>, transform_indices = @transform_1, window_bounds = array<i64: 16, 128>}, {pipeline_mode = #tpu.pipeline_mode<synchronous>, transform_indices = @transform_2, window_bounds = array<i64: 1, 128>}, {pipeline_mode = #tpu.pipeline_mode<synchronous>, transform_indices = @transform_3, window_bounds = array<i64: 1024, 128>}, {transform_indices = @transform_4, window_bounds = array<i64: 8, 128>}]} {
    %c0 = arith.constant 0 : index
    %c0_0 = arith.constant 0 : index
    %0 = vector.load %arg1[%c0, %c0_0] : memref<64x16xf32, #tpu.memory_space<vmem>>, vector<64x16xf32>
    %c0_1 = arith.constant 0 : index
    %c0_2 = arith.constant 0 : index
    %1 = vector.load %arg2[%c0_1, %c0_2] : memref<16x128xf32, #tpu.memory_space<vmem>>, vector<16x128xf32>
    %cst = arith.constant dense<0.000000e+00> : vector<64x128xf32>
    %2 = tpu.matmul %0, %1, %cst {dimension_numbers = #tpu.dot_dimension_numbers<[1], [0], [0], [1], [0, 0, 1, 1], [], []>} : vector<64x16xf32>, vector<16x128xf32>, vector<64x128xf32> -> vector<64x128xf32>
    %c0_3 = arith.constant 0 : index
    %c0_4 = arith.constant 0 : index
    %3 = vector.load %arg3[%c0_3, %c0_4] : memref<1x128xf32, #tpu.memory_space<vmem>>, vector<1x128xf32>
    %4 = vector.broadcast %3 : vector<1x128xf32> to vector<64x128xf32>
    %5 = arith.subf %4, %2 : vector<64x128xf32>
    %cst_5 = arith.constant dense<0x7F800000> : vector<64xf32>
    %6 = vector.multi_reduction <minimumf>, %5, %cst_5 [1] : vector<64x128xf32> to vector<64xf32>
    %7 = vector.shape_cast %6 : vector<64xf32> to vector<64x1xf32>
    %8 = vector.broadcast %7 : vector<64x1xf32> to vector<64x128xf32>
    %9 = arith.cmpf oeq, %5, %8 : vector<64x128xf32>
    %10 = arith.extui %9 : vector<64x128xi1> to vector<64x128xi32>
    %11 = arith.sitofp %10 : vector<64x128xi32> to vector<64x128xf32>
    %12 = vector.extract_strided_slice %11 {offsets = [0, 0], sizes = [8, 128], strides = [1, 1]} : vector<64x128xf32> to vector<8x128xf32>
    %13 = vector.extract_strided_slice %11 {offsets = [8, 0], sizes = [8, 128], strides = [1, 1]} : vector<64x128xf32> to vector<8x128xf32>
    %14 = vector.extract_strided_slice %11 {offsets = [16, 0], sizes = [8, 128], strides = [1, 1]} : vector<64x128xf32> to vector<8x128xf32>
    %15 = vector.extract_strided_slice %11 {offsets = [24, 0], sizes = [8, 128], strides = [1, 1]} : vector<64x128xf32> to vector<8x128xf32>
    %16 = vector.extract_strided_slice %11 {offsets = [32, 0], sizes = [8, 128], strides = [1, 1]} : vector<64x128xf32> to vector<8x128xf32>
    %17 = vector.extract_strided_slice %11 {offsets = [40, 0], sizes = [8, 128], strides = [1, 1]} : vector<64x128xf32> to vector<8x128xf32>
    %18 = vector.extract_strided_slice %11 {offsets = [48, 0], sizes = [8, 128], strides = [1, 1]} : vector<64x128xf32> to vector<8x128xf32>
    %19 = vector.extract_strided_slice %11 {offsets = [56, 0], sizes = [8, 128], strides = [1, 1]} : vector<64x128xf32> to vector<8x128xf32>
    %20 = tpu.concatenate %12, %13, %14, %15, %16, %17, %18, %19 in 1 : vector<8x128xf32>, vector<8x128xf32>, vector<8x128xf32>, vector<8x128xf32>, vector<8x128xf32>, vector<8x128xf32>, vector<8x128xf32>, vector<8x128xf32> -> vector<8x1024xf32>
    %c0_6 = arith.constant 0 : index
    %c0_7 = arith.constant 0 : index
    %21 = vector.load %arg4[%c0_6, %c0_7] : memref<1024x128xf32, #tpu.memory_space<vmem>>, vector<1024x128xf32>
    %cst_8 = arith.constant dense<0.000000e+00> : vector<8x128xf32>
    %22 = tpu.matmul %20, %21, %cst_8 {dimension_numbers = #tpu.dot_dimension_numbers<[1], [0], [0], [1], [0, 0, 1, 1], [], []>} : vector<8x1024xf32>, vector<1024x128xf32>, vector<8x128xf32> -> vector<8x128xf32>
    %c0_9 = arith.constant 0 : index
    %c0_10 = arith.constant 0 : index
    %23 = vector.load %arg5[%c0_9, %c0_10] : memref<8x128xf32, #tpu.memory_space<vmem>>, vector<8x128xf32>
    tpu.vector_store %arg5[%c0_9, %c0_10], %22 {strides = array<i32>} : memref<8x128xf32, #tpu.memory_space<vmem>>, vector<8x128xf32>,
    return
  }
  func.func @transform_0(%arg0: i32) -> (i32, i32) {
    %c0_i32 = arith.constant 0 : i32
    %c0_i32_0 = arith.constant 0 : i32
    return %arg0, %c0_i32 : i32, i32
  }
  func.func @transform_1(%arg0: i32) -> (i32, i32) {
    %c0_i32 = arith.constant 0 : i32
    %c0_i32_0 = arith.constant 0 : i32
    %c0_i32_1 = arith.constant 0 : i32
    return %c0_i32, %c0_i32_0 : i32, i32
  }
  func.func @transform_2(%arg0: i32) -> (i32, i32) {
    %c0_i32 = arith.constant 0 : i32
    %c0_i32_0 = arith.constant 0 : i32
    %c0_i32_1 = arith.constant 0 : i32
    return %c0_i32, %c0_i32_0 : i32, i32
  }
  func.func @transform_3(%arg0: i32) -> (i32, i32) {
    %c0_i32 = arith.constant 0 : i32
    %c0_i32_0 = arith.constant 0 : i32
    %c0_i32_1 = arith.constant 0 : i32
    return %c0_i32, %c0_i32_0 : i32, i32
  }
  func.func @transform_4(%arg0: i32) -> (i32, i32) {
    %c0_i32 = arith.constant 0 : i32
    %c0_i32_0 = arith.constant 0 : i32
    return %arg0, %c0_i32 : i32, i32
  }
}

</mosaic_0001>

<llo_original>
// kernel: codebook_forward.1
$region0: #{codebook_forward.1}
  #allocation0 [shape = 'u32[]', space=smem, size = 0x4, offset = 0x4, fixed_abs, tag = 'smem constant byte address 0x4 - core index']
  #allocation1 [shape = 'u32[72,128]{1,0:T(1,128)}', space=vmem, size = 0x9000, scoped, tag = 'internal scratch']
  %s0 = inlined_call_operand.vmem [shape: f32[128,16], index: 0, kind: input, shape index: {}]
  %s1 = inlined_call_operand.vmem [shape: f32[16,128], index: 1, kind: input, shape index: {}]
  %s2 = inlined_call_operand.vmem [shape: f32[1,128], index: 2, kind: input, shape index: {}]
  %s3 = inlined_call_operand.vmem [shape: f32[1024,128], index: 3, kind: input, shape index: {}]
  %s4 = inlined_call_operand.vmem [shape: f32[16,128], index: 4, kind: output, shape index: {}]
  %s5 = sld [smem:[#allocation0]]
  $region49: #{codebook_forward.1} parent=0
    _
  %s7 = ssub.s32 1, %s5
  %s8 = scalar_select 0, %s7, %s5
  loop: start=0, step=1, limit=4
  $region2: #{codebook_forward.1} parent=0 // loop_pre_header
    _
  $region3: #{codebook_forward.1} parent=0 // loop_header
    %s10 = sphi 0, %s14
    %p11 = scmp.ge.s32.totalorder %s10, 4
    %s20 = sphi 0, %s22
    %s23 = sphi 0, %s20
    %s24 = sphi 0, %s23
    %s40 = sphi 0, %s24
    %s44 = sphi 0, %s44
    %s46 = sphi 0, %s44
    %s47 = sphi 0, %s46
    %s61 = sphi 0, %s47
    %s65 = sphi 0, %s65
    %s67 = sphi 0, %s65
    %s68 = sphi 0, %s67
    %s82 = sphi 0, %s68
    %s86 = sphi 0, %s86
    %s88 = sphi 0, %s86
    %s89 = sphi 0, %s88
    %s103 = sphi 0, %s89
    %s109 = sphi 0, %s111
    %s112 = sphi 0, %s109
    %s113 = sphi 0, %s112
    %s129 = sphi 0, %s113
  $region4: #{codebook_forward.1} parent=0 // loop_header_branch
    %13 = sbr.rel (%p11) target = $region8
  $region5: #{codebook_forward.1} parent=0 // loop_body
    %s15 = ssub.s32 %s10, 1
    %s16 = ssub.s32 %s10, 2
    %s17 = sadd.s32 %s10, 1
    %s18 = ssub.s32 %s10, %s17
    %p19 = scmp.eq.s32.totalorder %s18, 0
    %s21 = sadd.s32 %s20, 1
    %s22 = scalar_select %p19, %s20, %s21
    %p25 = pneg %p19
    %p26 = scmp.eq.s32.totalorder %s10, 1
    %p27 = por %p25, %p26
    %p28 = scmp.ne.s32.totalorder %s20, %s23
    %p29 = scmp.eq.s32.totalorder %s10, 0
    %p30 = por %p28, %p29
    %p31 = scmp.ne.s32.totalorder %s20, %s23
    %p32 = scmp.eq.s32.totalorder %s15, 1
    %p33 = por %p31, %p32
    %p34 = scmp.ne.s32.totalorder %s23, %s24
    %p35 = scmp.eq.s32.totalorder %s15, 0
    %p36 = por %p34, %p35
    %p37 = scmp.ne.s32.totalorder %s23, %s24
    %p38 = scmp.eq.s32.totalorder %s16, 1
    %p39 = por %p37, %p38
    %p41 = scmp.ne.s32.totalorder %s24, %s40
    %p42 = scmp.eq.s32.totalorder %s16, 0
    %p43 = por %p41, %p42
    %s45 = sadd.s32 %s44, 1
    %p48 = scmp.eq.s32.totalorder %s10, 1
    %p49 = scmp.ne.s32.totalorder %s44, %s46
    %p50 = scmp.eq.s32.totalorder %s10, 0
    %p51 = por %p49, %p50
    %p52 = scmp.ne.s32.totalorder %s44, %s46
    %p53 = scmp.eq.s32.totalorder %s15, 1
    %p54 = por %p52, %p53
    %p55 = scmp.ne.s32.totalorder %s46, %s47
    %p56 = scmp.eq.s32.totalorder %s15, 0
    %p57 = por %p55, %p56
    %p58 = scmp.ne.s32.totalorder %s46, %s47
    %p59 = scmp.eq.s32.totalorder %s16, 1
    %p60 = por %p58, %p59
    %p62 = scmp.ne.s32.totalorder %s47, %s61
    %p63 = scmp.eq.s32.totalorder %s16, 0
    %p64 = por %p62, %p63
    %s66 = sadd.s32 %s65, 1
    %p69 = scmp.eq.s32.totalorder %s10, 1
    %p70 = scmp.ne.s32.totalorder %s65, %s67
    %p71 = scmp.eq.s32.totalorder %s10, 0
    %p72 = por %p70, %p71
    %p73 = scmp.ne.s32.totalorder %s65, %s67
    %p74 = scmp.eq.s32.totalorder %s15, 1
    %p75 = por %p73, %p74
    %p76 = scmp.ne.s32.totalorder %s67, %s68
    %p77 = scmp.eq.s32.totalorder %s15, 0
    %p78 = por %p76, %p77
    %p79 = scmp.ne.s32.totalorder %s67, %s68
    %p80 = scmp.eq.s32.totalorder %s16, 1
    %p81 = por %p79, %p80
    %p83 = scmp.ne.s32.totalorder %s68, %s82
    %p84 = scmp.eq.s32.totalorder %s16, 0
    %p85 = por %p83, %p84
    %s87 = sadd.s32 %s86, 1
    %p90 = scmp.eq.s32.totalorder %s10, 1
    %p91 = scmp.ne.s32.totalorder %s86, %s88
    %p92 = scmp.eq.s32.totalorder %s10, 0
    %p93 = por %p91, %p92
    %p94 = scmp.ne.s32.totalorder %s86, %s88
    %p95 = scmp.eq.s32.totalorder %s15, 1
    %p96 = por %p94, %p95
    %p97 = scmp.ne.s32.totalorder %s88, %s89
    %p98 = scmp.eq.s32.totalorder %s15, 0
    %p99 = por %p97, %p98
    %p100 = scmp.ne.s32.totalorder %s88, %s89
    %p101 = scmp.eq.s32.totalorder %s16, 1
    %p102 = por %p100, %p101
    %p104 = scmp.ne.s32.totalorder %s89, %s103
    %p105 = scmp.eq.s32.totalorder %s16, 0
    %p106 = por %p104, %p105
    %s107 = ssub.s32 %s10, %s17
    %p108 = scmp.eq.s32.totalorder %s107, 0
    %s110 = sadd.s32 %s109, 1
    %s111 = scalar_select %p108, %s109, %s110
    %p114 = pneg %p108
    %p115 = scmp.eq.s32.totalorder %s10, 1
    %p116 = por %p114, %p115
    %p117 = scmp.ne.s32.totalorder %s109, %s112
    %p118 = scmp.eq.s32.totalorder %s10, 0
    %p119 = por %p117, %p118
    %p120 = scmp.ne.s32.totalorder %s109, %s112
    %p121 = scmp.eq.s32.totalorder %s15, 1
    %p122 = por %p120, %p121
    %p123 = scmp.ne.s32.totalorder %s112, %s113
    %p124 = scmp.eq.s32.totalorder %s15, 0
    %p125 = por %p123, %p124
    %p126 = scmp.ne.s32.totalorder %s112, %s113
    %p127 = scmp.eq.s32.totalorder %s16, 1
    %p128 = por %p126, %p127
    %p130 = scmp.ne.s32.totalorder %s113, %s129
    %p131 = scmp.eq.s32.totalorder %s16, 0
    %p132 = por %p130, %p131
    %p133 = scmp.le.s32.totalorder 1, %s10
    %p134 = scmp.lt.s32.totalorder %s10, 3
    %p135 = pnand %p133, %p134
    %p136 = pneg %p135
    // Predicated region
    $region9: #{codebook_forward.1} parent=5 // pred_check
      _
    $region10: #{codebook_forward.1} parent=5 // pred_check_branch
      %138 = sbr.rel (%p135) target = $region12
    $region11: #{codebook_forward.1} parent=5 // pred_region
      %s139 = ssub.s32 %s10, 1
      // Predicated region
      $region13: #{codebook_forward.1} parent=11 // pred_check
        %p140 = pneg %p57
      $region14: #{codebook_forward.1} parent=11 // pred_check_branch
        %142 = sbr.rel (%p140) target = $region16
      $region15: #{codebook_forward.1} parent=11 // pred_region
        _
      $region16: #{codebook_forward.1} parent=11 // pred_fallthru
        _
      // Predicated region
      $region17: #{codebook_forward.1} parent=11 // pred_check
        %p143 = pneg %p78
      $region18: #{codebook_forward.1} parent=11 // pred_check_branch
        %145 = sbr.rel (%p143) target = $region20
      $region19: #{codebook_forward.1} parent=11 // pred_region
        _
      $region20: #{codebook_forward.1} parent=11 // pred_fallthru
        _
      // Predicated region
      $region21: #{codebook_forward.1} parent=11 // pred_check
        %p146 = pneg %p99
      $region22: #{codebook_forward.1} parent=11 // pred_check_branch
        %148 = sbr.rel (%p146) target = $region24
      $region23: #{codebook_forward.1} parent=11 // pred_region
        _
      $region24: #{codebook_forward.1} parent=11 // pred_fallthru
        _
    $region12: #{codebook_forward.1} parent=5 // pred_fallthru
      _
    %p149 = scmp.lt.s32.totalorder %s10, 2
    // Predicated region
    $region25: #{codebook_forward.1} parent=5 // pred_check
      %p150 = pneg %p149
    $region26: #{codebook_forward.1} parent=5 // pred_check_branch
      %152 = sbr.rel (%p150) target = $region28
    $region27: #{codebook_forward.1} parent=5 // pred_region
      // Predicated region
      $region29: #{codebook_forward.1} parent=27 // pred_check
        %p153 = pneg %p30
      $region30: #{codebook_forward.1} parent=27 // pred_check_branch
        %155 = sbr.rel (%p153) target = $region32
      $region31: #{codebook_forward.1} parent=27 // pred_region
        %s156 = smul.u32 8, %s10
        %p157 = scmp.lt.s32.totalorder %s156, 15
        %s158 = scalar_select %p157, %s156, 15
        %s159 = smul.addr %s158, 8
        %s160 = scalar_lea.vmem %s0, %s159
        %s161 = smul.u32 8, %s10
      $region32: #{codebook_forward.1} parent=27 // pred_fallthru
        _
    $region28: #{codebook_forward.1} parent=5 // pred_fallthru
      _
    %p162 = scmp.le.s32.totalorder 1, %s10
    %p163 = scmp.lt.s32.totalorder %s10, 3
    %p164 = pnand %p162, %p163
    %p165 = pneg %p164
    // Predicated region
    $region33: #{codebook_forward.1} parent=5 // pred_check
      _
    $region34: #{codebook_forward.1} parent=5 // pred_check_branch
      %167 = sbr.rel (%p164) target = $region36
    $region35: #{codebook_forward.1} parent=5 // pred_region
      %s168 = ssub.s32 %s10, 1
      %s169 = smul.u32 8, %s15
      %p170 = scmp.lt.s32.totalorder %s169, 15
      %s171 = scalar_select %p170, %s169, 15
      %s172 = smul.addr %s171, 8
      %s173 = scalar_lea.vmem %s0, %s172
      %p174 = pneg %p36
      %p175 = pneg %p33
      %p176 = pneg %p57
      %p177 = pneg %p54
      %p178 = pneg %p78
      %p179 = pneg %p75
      %p180 = pneg %p99
      %p181 = pneg %p96
      %p182 = pneg %p125
      %p183 = pneg %p122
      %p184 = scmp.lt.s32.totalorder %s15, 1
      %s185 = scalar_select %p184, %s15, 1
      %s186 = smul.addr %s185, 8
      %s187 = scalar_lea.vmem %s4, %s186
      %s188 = smul.u32 8, %s15
      %p189 = scmp.lt.s32.totalorder %s188, 15
      %s190 = scalar_select %p189, %s188, 15
      %s191 = smul.addr %s190, 8
      %s192 = scalar_lea.vmem %s0, %s191
      %s193 = smul.u32 8, %s15
      %p194 = scmp.lt.s32.totalorder %s15, 1
      %s195 = scalar_select %p194, %s15, 1
      %s196 = smul.addr %s195, 8
      %s197 = scalar_lea.vmem %s4, %s196
      %v198 = vld [vmem:[%s192] sm:$0xff]
      %v199 = vld [vmem:[%s192 + $0x8] sm:$0xff]
      %v200 = vld [vmem:[%s192 + $0x10] sm:$0xff]
      %v201 = vld [vmem:[%s192 + $0x18] sm:$0xff]
      %v202 = vld [vmem:[%s192 + $0x20] sm:$0xff]
      %v203 = vld [vmem:[%s192 + $0x28] sm:$0xff]
      %v204 = vld [vmem:[%s192 + $0x30] sm:$0xff]
      %v205 = vld [vmem:[%s192 + $0x38] sm:$0xff]
      %v206 = vld [vmem:[%s1] sm:$0xff]
      %v207 = vld [vmem:[%s1 + $0x8] sm:$0xff]
      %vm208 = vcmask 130048
      %v210 = vsel %vm208, %v198, 0
      %v213 = vsel %vm208, %v199, 0
      %v216 = vsel %vm208, %v200, 0
      %v219 = vsel %vm208, %v201, 0
      %v222 = vsel %vm208, %v202, 0
      %v225 = vsel %vm208, %v203, 0
      %v228 = vsel %vm208, %v204, 0
      %v231 = vsel %vm208, %v205, 0
      %233 = vmatpush.msra.mxu0 0.0
      %234 = vmatpush.msra.mxu0 0.0
      %235 = vmatpush.msra.mxu0 0.0
      %236 = vmatpush.msra.mxu0 0.0
      %237 = vmatpush.msra.mxu0 0.0
      %238 = vmatpush.msra.mxu0 0.0
      %239 = vmatpush.msra.mxu0 0.0
      %240 = vmatpush.msra.mxu0 0.0
      %241 = vmatpush.msra.mxu0 0.0
      %242 = vmatpush.msra.mxu0 0.0
      %243 = vmatpush.msra.mxu0 0.0
      %244 = vmatpush.msra.mxu0 0.0
      %245 = vmatpush.msra.mxu0 0.0
      %246 = vmatpush.msra.mxu0 0.0
      %247 = vmatpush.msra.mxu0 %v207
      %248 = vmatpush.msra.mxu0 %v206
      %249 = vmatmul.f32.gmra.mxu0 %v210
      %v250 = vpop.f32.mrf.mxu0
      %v251 = vadd.f32 0.0, %v250
      %252 = vmatmul.f32.gmra.mxu0 %v213
      %v253 = vpop.f32.mrf.mxu0
      %v254 = vadd.f32 0.0, %v253
      %255 = vmatmul.f32.gmra.mxu0 %v216
      %v256 = vpop.f32.mrf.mxu0
      %v257 = vadd.f32 0.0, %v256
      %258 = vmatmul.f32.gmra.mxu0 %v219
      %v259 = vpop.f32.mrf.mxu0
      %v260 = vadd.f32 0.0, %v259
      %261 = vmatmul.f32.gmra.mxu0 %v222
      %v262 = vpop.f32.mrf.mxu0
      %v263 = vadd.f32 0.0, %v262
      %264 = vmatmul.f32.gmra.mxu0 %v225
      %v265 = vpop.f32.mrf.mxu0
      %v266 = vadd.f32 0.0, %v265
      %267 = vmatmul.f32.gmra.mxu0 %v228
      %v268 = vpop.f32.mrf.mxu0
      %v269 = vadd.f32 0.0, %v268
      %270 = vmatmul.f32.gmra.mxu0 %v231
      %v271 = vpop.f32.mrf.mxu0
      %v272 = vadd.f32 0.0, %v271
      %273 = vdwg.mxu0
      %v274 = vld [vmem:[%s2] sm:$0x1]
      %v276 = vperm.slane %v274, 0
      %v278 = vsub.f32 %v276, %v251
      %v279 = vsub.f32 %v276, %v254
      %v280 = vsub.f32 %v276, %v257
      %v281 = vsub.f32 %v276, %v260
      %v282 = vsub.f32 %v276, %v263
      %v283 = vsub.f32 %v276, %v266
      %v284 = vsub.f32 %v276, %v269
      %v285 = vsub.f32 %v276, %v272
      %286 = vmin.xlane.f32.xlu0 %v278
      %v287 = vpop.xlane.xlu0 %286
      %288 = vmin.xlane.f32.xlu0 %v279
      %v289 = vpop.xlane.xlu0 %288
      %290 = vmin.xlane.f32.xlu0 %v280
      %v291 = vpop.xlane.xlu0 %290
      %292 = vmin.xlane.f32.xlu0 %v281
      %v293 = vpop.xlane.xlu0 %292
      %294 = vmin.xlane.f32.xlu0 %v282
      %v295 = vpop.xlane.xlu0 %294
      %296 = vmin.xlane.f32.xlu0 %v283
      %v297 = vpop.xlane.xlu0 %296
      %298 = vmin.xlane.f32.xlu0 %v284
      %v299 = vpop.xlane.xlu0 %298
      %300 = vmin.xlane.f32.xlu0 %v285
      %v301 = vpop.xlane.xlu0 %300
      %vm302 = vcmp.eq.f32.partialorder %v278, %v287
      %vm303 = vcmp.eq.f32.partialorder %v279, %v289
      %vm304 = vcmp.eq.f32.partialorder %v280, %v291
      %vm305 = vcmp.eq.f32.partialorder %v281, %v293
      %vm306 = vcmp.eq.f32.partialorder %v282, %v295
      %vm307 = vcmp.eq.f32.partialorder %v283, %v297
      %vm308 = vcmp.eq.f32.partialorder %v284, %v299
      %vm309 = vcmp.eq.f32.partialorder %v285, %v301
      %v310 = vsel %vm302, 1, 0
      %v311 = vsel %vm303, 1, 0
      %v312 = vsel %vm304, 1, 0
      %v313 = vsel %vm305, 1, 0
      %v314 = vsel %vm306, 1, 0
      %v315 = vsel %vm307, 1, 0
      %v316 = vsel %vm308, 1, 0
      %v317 = vsel %vm309, 1, 0
      %v318 = vcvt.s32.f32 %v310
      %v319 = vcvt.s32.f32 %v311
      %v320 = vcvt.s32.f32 %v312
      %v321 = vcvt.s32.f32 %v313
      %v322 = vcvt.s32.f32 %v314
      %v323 = vcvt.s32.f32 %v315
      %v324 = vcvt.s32.f32 %v316
      %v325 = vcvt.s32.f32 %v317
      %v326 = vld [vmem:[%s3] sm:$0xff]
      %v327 = vld [vmem:[%s3 + $0x8] sm:$0xff]
      %v328 = vld [vmem:[%s3 + $0x10] sm:$0xff]
      %v329 = vld [vmem:[%s3 + $0x18] sm:$0xff]
      %v330 = vld [vmem:[%s3 + $0x20] sm:$0xff]
      %v331 = vld [vmem:[%s3 + $0x28] sm:$0xff]
      %v332 = vld [vmem:[%s3 + $0x30] sm:$0xff]
      %v333 = vld [vmem:[%s3 + $0x38] sm:$0xff]
      %v334 = vld [vmem:[%s3 + $0x40] sm:$0xff]
      %v335 = vld [vmem:[%s3 + $0x48] sm:$0xff]
      %v336 = vld [vmem:[%s3 + $0x50] sm:$0xff]
      %v337 = vld [vmem:[%s3 + $0x58] sm:$0xff]
      %v338 = vld [vmem:[%s3 + $0x60] sm:$0xff]
      %v339 = vld [vmem:[%s3 + $0x68] sm:$0xff]
      %v340 = vld [vmem:[%s3 + $0x70] sm:$0xff]
      %v341 = vld [vmem:[%s3 + $0x78] sm:$0xff]
      %v342 = vld [vmem:[%s3 + $0x80] sm:$0xff]
      %v343 = vld [vmem:[%s3 + $0x88] sm:$0xff]
      %v344 = vld [vmem:[%s3 + $0x90] sm:$0xff]
      %v345 = vld [vmem:[%s3 + $0x98] sm:$0xff]
      %v346 = vld [vmem:[%s3 + $0xa0] sm:$0xff]
      %v347 = vld [vmem:[%s3 + $0xa8] sm:$0xff]
      %v348 = vld [vmem:[%s3 + $0xb0] sm:$0xff]
      %v349 = vld [vmem:[%s3 + $0xb8] sm:$0xff]
      %v350 = vld [vmem:[%s3 + $0xc0] sm:$0xff]
      %v351 = vld [vmem:[%s3 + $0xc8] sm:$0xff]
      %v352 = vld [vmem:[%s3 + $0xd0] sm:$0xff]
      %v353 = vld [vmem:[%s3 + $0xd8] sm:$0xff]
      %v354 = vld [vmem:[%s3 + $0xe0] sm:$0xff]
      %v355 = vld [vmem:[%s3 + $0xe8] sm:$0xff]
      %v356 = vld [vmem:[%s3 + $0xf0] sm:$0xff]
      %v357 = vld [vmem:[%s3 + $0xf8] sm:$0xff]
      %v358 = vld [vmem:[%s3 + $0x100] sm:$0xff]
      %v359 = vld [vmem:[%s3 + $0x108] sm:$0xff]
      %v360 = vld [vmem:[%s3 + $0x110] sm:$0xff]
      %v361 = vld [vmem:[%s3 + $0x118] sm:$0xff]
      %v362 = vld [vmem:[%s3 + $0x120] sm:$0xff]
      %v363 = vld [vmem:[%s3 + $0x128] sm:$0xff]
      %v364 = vld [vmem:[%s3 + $0x130] sm:$0xff]
      %v365 = vld [vmem:[%s3 + $0x138] sm:$0xff]
      %v366 = vld [vmem:[%s3 + $0x140] sm:$0xff]
      %v367 = vld [vmem:[%s3 + $0x148] sm:$0xff]
      %v368 = vld [vmem:[%s3 + $0x150] sm:$0xff]
      %v369 = vld [vmem:[%s3 + $0x158] sm:$0xff]
      %v370 = vld [vmem:[%s3 + $0x160] sm:$0xff]
      %v371 = vld [vmem:[%s3 + $0x168] sm:$0xff]
      %v372 = vld [vmem:[%s3 + $0x170] sm:$0xff]
      %v373 = vld [vmem:[%s3 + $0x178] sm:$0xff]
      %v374 = vld [vmem:[%s3 + $0x180] sm:$0xff]
      %v375 = vld [vmem:[%s3 + $0x188] sm:$0xff]
      %v376 = vld [vmem:[%s3 + $0x190] sm:$0xff]
      %v377 = vld [vmem:[%s3 + $0x198] sm:$0xff]
      %v378 = vld [vmem:[%s3 + $0x1a0] sm:$0xff]
      %v379 = vld [vmem:[%s3 + $0x1a8] sm:$0xff]
      %v380 = vld [vmem:[%s3 + $0x1b0] sm:$0xff]
      %v381 = vld [vmem:[%s3 + $0x1b8] sm:$0xff]
      %v382 = vld [vmem:[%s3 + $0x1c0] sm:$0xff]
      %v383 = vld [vmem:[%s3 + $0x1c8] sm:$0xff]
      %v384 = vld [vmem:[%s3 + $0x1d0] sm:$0xff]
      %v385 = vld [vmem:[%s3 + $0x1d8] sm:$0xff]
      %v386 = vld [vmem:[%s3 + $0x1e0] sm:$0xff]
      %v387 = vld [vmem:[%s3 + $0x1e8] sm:$0xff]
      %v388 = vld [vmem:[%s3 + $0x1f0] sm:$0xff]
      %v389 = vld [vmem:[%s3 + $0x1f8] sm:$0xff]
      %v390 = vld [vmem:[%s3 + $0x200] sm:$0xff]
      %v391 = vld [vmem:[%s3 + $0x208] sm:$0xff]
      %v392 = vld [vmem:[%s3 + $0x210] sm:$0xff]
      %v393 = vld [vmem:[%s3 + $0x218] sm:$0xff]
      %v394 = vld [vmem:[%s3 + $0x220] sm:$0xff]
      %v395 = vld [vmem:[%s3 + $0x228] sm:$0xff]
      %v396 = vld [vmem:[%s3 + $0x230] sm:$0xff]
      %v397 = vld [vmem:[%s3 + $0x238] sm:$0xff]
      %v398 = vld [vmem:[%s3 + $0x240] sm:$0xff]
      %v399 = vld [vmem:[%s3 + $0x248] sm:$0xff]
      %v400 = vld [vmem:[%s3 + $0x250] sm:$0xff]
      %v401 = vld [vmem:[%s3 + $0x258] sm:$0xff]
      %v402 = vld [vmem:[%s3 + $0x260] sm:$0xff]
      %v403 = vld [vmem:[%s3 + $0x268] sm:$0xff]
      %v404 = vld [vmem:[%s3 + $0x270] sm:$0xff]
      %v405 = vld [vmem:[%s3 + $0x278] sm:$0xff]
      %v406 = vld [vmem:[%s3 + $0x280] sm:$0xff]
      %v407 = vld [vmem:[%s3 + $0x288] sm:$0xff]
      %v408 = vld [vmem:[%s3 + $0x290] sm:$0xff]
      %v409 = vld [vmem:[%s3 + $0x298] sm:$0xff]
      %v410 = vld [vmem:[%s3 + $0x2a0] sm:$0xff]
      %v411 = vld [vmem:[%s3 + $0x2a8] sm:$0xff]
      %v412 = vld [vmem:[%s3 + $0x2b0] sm:$0xff]
      %v413 = vld [vmem:[%s3 + $0x2b8] sm:$0xff]
      %v414 = vld [vmem:[%s3 + $0x2c0] sm:$0xff]
      %v415 = vld [vmem:[%s3 + $0x2c8] sm:$0xff]
      %v416 = vld [vmem:[%s3 + $0x2d0] sm:$0xff]
      %v417 = vld [vmem:[%s3 + $0x2d8] sm:$0xff]
      %v418 = vld [vmem:[%s3 + $0x2e0] sm:$0xff]
      %v419 = vld [vmem:[%s3 + $0x2e8] sm:$0xff]
      %v420 = vld [vmem:[%s3 + $0x2f0] sm:$0xff]
      %v421 = vld [vmem:[%s3 + $0x2f8] sm:$0xff]
      %v422 = vld [vmem:[%s3 + $0x300] sm:$0xff]
      %v423 = vld [vmem:[%s3 + $0x308] sm:$0xff]
      %v424 = vld [vmem:[%s3 + $0x310] sm:$0xff]
      %v425 = vld [vmem:[%s3 + $0x318] sm:$0xff]
      %v426 = vld [vmem:[%s3 + $0x320] sm:$0xff]
      %v427 = vld [vmem:[%s3 + $0x328] sm:$0xff]
      %v428 = vld [vmem:[%s3 + $0x330] sm:$0xff]
      %v429 = vld [vmem:[%s3 + $0x338] sm:$0xff]
      %v430 = vld [vmem:[%s3 + $0x340] sm:$0xff]
      %v431 = vld [vmem:[%s3 + $0x348] sm:$0xff]
      %v432 = vld [vmem:[%s3 + $0x350] sm:$0xff]
      %v433 = vld [vmem:[%s3 + $0x358] sm:$0xff]
      %v434 = vld [vmem:[%s3 + $0x360] sm:$0xff]
      %v435 = vld [vmem:[%s3 + $0x368] sm:$0xff]
      %v436 = vld [vmem:[%s3 + $0x370] sm:$0xff]
      %v437 = vld [vmem:[%s3 + $0x378] sm:$0xff]
      %v438 = vld [vmem:[%s3 + $0x380] sm:$0xff]
      %v439 = vld [vmem:[%s3 + $0x388] sm:$0xff]
      %v440 = vld [vmem:[%s3 + $0x390] sm:$0xff]
      %v441 = vld [vmem:[%s3 + $0x398] sm:$0xff]
      %v442 = vld [vmem:[%s3 + $0x3a0] sm:$0xff]
      %v443 = vld [vmem:[%s3 + $0x3a8] sm:$0xff]
      %v444 = vld [vmem:[%s3 + $0x3b0] sm:$0xff]
      %v445 = vld [vmem:[%s3 + $0x3b8] sm:$0xff]
      %v446 = vld [vmem:[%s3 + $0x3c0] sm:$0xff]
      %v447 = vld [vmem:[%s3 + $0x3c8] sm:$0xff]
      %v448 = vld [vmem:[%s3 + $0x3d0] sm:$0xff]
      %v449 = vld [vmem:[%s3 + $0x3d8] sm:$0xff]
      %v450 = vld [vmem:[%s3 + $0x3e0] sm:$0xff]
      %v451 = vld [vmem:[%s3 + $0x3e8] sm:$0xff]
      %v452 = vld [vmem:[%s3 + $0x3f0] sm:$0xff]
      %v453 = vld [vmem:[%s3 + $0x3f8] sm:$0xff]
      %454 = vmatpush.msra.mxu0 %v341
      %455 = vmatpush.msra.mxu0 %v340
      %456 = vmatpush.msra.mxu0 %v339
      %457 = vmatpush.msra.mxu0 %v338
      %458 = vmatpush.msra.mxu0 %v337
      %459 = vmatpush.msra.mxu0 %v336
      %460 = vmatpush.msra.mxu0 %v335
      %461 = vmatpush.msra.mxu0 %v334
      %462 = vmatpush.msra.mxu0 %v333
      %463 = vmatpush.msra.mxu0 %v332
      %464 = vmatpush.msra.mxu0 %v331
      %465 = vmatpush.msra.mxu0 %v330
      %466 = vmatpush.msra.mxu0 %v329
      %467 = vmatpush.msra.mxu0 %v328
      %468 = vmatpush.msra.mxu0 %v327
      %469 = vmatpush.msra.mxu0 %v326
      %470 = vmatmul.f32.gmra.mxu0 %v318
      %v471 = vpop.f32.mrf.mxu0
      %v472 = vadd.f32 0.0, %v471
      %473 = vdwg.mxu0
      %474 = vmatpush.msra.mxu0 %v357
      %475 = vmatpush.msra.mxu0 %v356
      %476 = vmatpush.msra.mxu0 %v355
      %477 = vmatpush.msra.mxu0 %v354
      %478 = vmatpush.msra.mxu0 %v353
      %479 = vmatpush.msra.mxu0 %v352
      %480 = vmatpush.msra.mxu0 %v351
      %481 = vmatpush.msra.mxu0 %v350
      %482 = vmatpush.msra.mxu0 %v349
      %483 = vmatpush.msra.mxu0 %v348
      %484 = vmatpush.msra.mxu0 %v347
      %485 = vmatpush.msra.mxu0 %v346
      %486 = vmatpush.msra.mxu0 %v345
      %487 = vmatpush.msra.mxu0 %v344
      %488 = vmatpush.msra.mxu0 %v343
      %489 = vmatpush.msra.mxu0 %v342
      %490 = vmatmul.f32.gmra.mxu0 %v319
      %v491 = vpop.f32.mrf.mxu0
      %v492 = vadd.f32 %v472, %v491
      %493 = vdwg.mxu0
      %494 = vmatpush.msra.mxu0 %v373
      %495 = vmatpush.msra.mxu0 %v372
      %496 = vmatpush.msra.mxu0 %v371
      %497 = vmatpush.msra.mxu0 %v370
      %498 = vmatpush.msra.mxu0 %v369
      %499 = vmatpush.msra.mxu0 %v368
      %500 = vmatpush.msra.mxu0 %v367
      %501 = vmatpush.msra.mxu0 %v366
      %502 = vmatpush.msra.mxu0 %v365
      %503 = vmatpush.msra.mxu0 %v364
      %504 = vmatpush.msra.mxu0 %v363
      %505 = vmatpush.msra.mxu0 %v362
      %506 = vmatpush.msra.mxu0 %v361
      %507 = vmatpush.msra.mxu0 %v360
      %508 = vmatpush.msra.mxu0 %v359
      %509 = vmatpush.msra.mxu0 %v358
      %510 = vmatmul.f32.gmra.mxu0 %v320
      %v511 = vpop.f32.mrf.mxu0
      %v512 = vadd.f32 %v492, %v511
      %513 = vdwg.mxu0
      %514 = vmatpush.msra.mxu0 %v389
      %515 = vmatpush.msra.mxu0 %v388
      %516 = vmatpush.msra.mxu0 %v387
      %517 = vmatpush.msra.mxu0 %v386
      %518 = vmatpush.msra.mxu0 %v385
      %519 = vmatpush.msra.mxu0 %v384
      %520 = vmatpush.msra.mxu0 %v383
      %521 = vmatpush.msra.mxu0 %v382
      %522 = vmatpush.msra.mxu0 %v381
      %523 = vmatpush.msra.mxu0 %v380
      %524 = vmatpush.msra.mxu0 %v379
      %525 = vmatpush.msra.mxu0 %v378
      %526 = vmatpush.msra.mxu0 %v377
      %527 = vmatpush.msra.mxu0 %v376
      %528 = vmatpush.msra.mxu0 %v375
      %529 = vmatpush.msra.mxu0 %v374
      %530 = vmatmul.f32.gmra.mxu0 %v321
      %v531 = vpop.f32.mrf.mxu0
      %v532 = vadd.f32 %v512, %v531
      %533 = vdwg.mxu0
      %534 = vmatpush.msra.mxu0 %v405
      %535 = vmatpush.msra.mxu0 %v404
      %536 = vmatpush.msra.mxu0 %v403
      %537 = vmatpush.msra.mxu0 %v402
      %538 = vmatpush.msra.mxu0 %v401
      %539 = vmatpush.msra.mxu0 %v400
      %540 = vmatpush.msra.mxu0 %v399
      %541 = vmatpush.msra.mxu0 %v398
      %542 = vmatpush.msra.mxu0 %v397
      %543 = vmatpush.msra.mxu0 %v396
      %544 = vmatpush.msra.mxu0 %v395
      %545 = vmatpush.msra.mxu0 %v394
      %546 = vmatpush.msra.mxu0 %v393
      %547 = vmatpush.msra.mxu0 %v392
      %548 = vmatpush.msra.mxu0 %v391
      %549 = vmatpush.msra.mxu0 %v390
      %550 = vmatmul.f32.gmra.mxu0 %v322
      %v551 = vpop.f32.mrf.mxu0
      %v552 = vadd.f32 %v532, %v551
      %553 = vdwg.mxu0
      %554 = vmatpush.msra.mxu0 %v421
      %555 = vmatpush.msra.mxu0 %v420
      %556 = vmatpush.msra.mxu0 %v419
      %557 = vmatpush.msra.mxu0 %v418
      %558 = vmatpush.msra.mxu0 %v417
      %559 = vmatpush.msra.mxu0 %v416
      %560 = vmatpush.msra.mxu0 %v415
      %561 = vmatpush.msra.mxu0 %v414
      %562 = vmatpush.msra.mxu0 %v413
      %563 = vmatpush.msra.mxu0 %v412
      %564 = vmatpush.msra.mxu0 %v411
      %565 = vmatpush.msra.mxu0 %v410
      %566 = vmatpush.msra.mxu0 %v409
      %567 = vmatpush.msra.mxu0 %v408
      %568 = vmatpush.msra.mxu0 %v407
      %569 = vmatpush.msra.mxu0 %v406
      %570 = vmatmul.f32.gmra.mxu0 %v323
      %v571 = vpop.f32.mrf.mxu0
      %v572 = vadd.f32 %v552, %v571
      %573 = vdwg.mxu0
      %574 = vmatpush.msra.mxu0 %v437
      %575 = vmatpush.msra.mxu0 %v436
      %576 = vmatpush.msra.mxu0 %v435
      %577 = vmatpush.msra.mxu0 %v434
      %578 = vmatpush.msra.mxu0 %v433
      %579 = vmatpush.msra.mxu0 %v432
      %580 = vmatpush.msra.mxu0 %v431
      %581 = vmatpush.msra.mxu0 %v430
      %582 = vmatpush.msra.mxu0 %v429
      %583 = vmatpush.msra.mxu0 %v428
      %584 = vmatpush.msra.mxu0 %v427
      %585 = vmatpush.msra.mxu0 %v426
      %586 = vmatpush.msra.mxu0 %v425
      %587 = vmatpush.msra.mxu0 %v424
      %588 = vmatpush.msra.mxu0 %v423
      %589 = vmatpush.msra.mxu0 %v422
      %590 = vmatmul.f32.gmra.mxu0 %v324
      %v591 = vpop.f32.mrf.mxu0
      %v592 = vadd.f32 %v572, %v591
      %593 = vdwg.mxu0
      %594 = vmatpush.msra.mxu0 %v453
      %595 = vmatpush.msra.mxu0 %v452
      %596 = vmatpush.msra.mxu0 %v451
      %597 = vmatpush.msra.mxu0 %v450
      %598 = vmatpush.msra.mxu0 %v449
      %599 = vmatpush.msra.mxu0 %v448
      %600 = vmatpush.msra.mxu0 %v447
      %601 = vmatpush.msra.mxu0 %v446
      %602 = vmatpush.msra.mxu0 %v445
      %603 = vmatpush.msra.mxu0 %v444
      %604 = vmatpush.msra.mxu0 %v443
      %605 = vmatpush.msra.mxu0 %v442
      %606 = vmatpush.msra.mxu0 %v441
      %607 = vmatpush.msra.mxu0 %v440
      %608 = vmatpush.msra.mxu0 %v439
      %609 = vmatpush.msra.mxu0 %v438
      %610 = vmatmul.f32.gmra.mxu0 %v325
      %v611 = vpop.f32.mrf.mxu0
      %v612 = vadd.f32 %v592, %v611
      %613 = vdwg.mxu0
      %614 = vst [vmem:[%s197] sm:$0xff] %v612
      %p615 = scmp.lt.s32.totalorder %s15, 1
      %s616 = scalar_select %p615, %s15, 1
      %s617 = smul.addr %s616, 8
      %s618 = scalar_lea.vmem %s4, %s617
      // Predicated region
      $region37: #{codebook_forward.1} parent=35 // pred_check
        %p619 = pneg %p122
      $region38: #{codebook_forward.1} parent=35 // pred_check_branch
        %621 = sbr.rel (%p619) target = $region40
      $region39: #{codebook_forward.1} parent=35 // pred_region
        _
      $region40: #{codebook_forward.1} parent=35 // pred_fallthru
        _
    $region36: #{codebook_forward.1} parent=5 // pred_fallthru
      _
    %p622 = scmp.le.s32.totalorder 2, %s10
    // Predicated region
    $region41: #{codebook_forward.1} parent=5 // pred_check
      %p623 = pneg %p622
    $region42: #{codebook_forward.1} parent=5 // pred_check_branch
      %625 = sbr.rel (%p623) target = $region44
    $region43: #{codebook_forward.1} parent=5 // pred_region
      %s626 = ssub.s32 %s10, 2
      // Predicated region
      $region45: #{codebook_forward.1} parent=43 // pred_check
        %p627 = pneg %p128
      $region46: #{codebook_forward.1} parent=43 // pred_check_branch
        %629 = sbr.rel (%p627) target = $region48
      $region47: #{codebook_forward.1} parent=43 // pred_region
        %p630 = scmp.lt.s32.totalorder %s16, 1
        %s631 = scalar_select %p630, %s16, 1
        %s632 = smul.addr %s631, 8
        %s633 = scalar_lea.vmem %s4, %s632
      $region48: #{codebook_forward.1} parent=43 // pred_fallthru
        _
    $region44: #{codebook_forward.1} parent=5 // pred_fallthru
      _
  $region6: #{codebook_forward.1} parent=0 // loop_footer
    %s14 = sadd.s32 1, %s10
  $region7: #{codebook_forward.1} parent=0 // loop_footer_branch
    %9 = sbr.rel target = $region3
  $region8: #{codebook_forward.1} parent=0 // loop_exit
    _

</llo_original>
